<compile_context>
chip_gen: v5e
topology: v5e:2x2
jax: 0.10.0
libtpu: 0.0.40
codegen_flags: <defaults>
</compile_context>

<pallas_src>
import functools

import jax
import jax.numpy as jnp
import numpy as np
from jax.experimental import pallas as pl
from jax.experimental.pallas import tpu as pltpu


def _focal_loss_kernel(x_ref, t_ref, out_ref, *, gamma, alpha, num_classes):
    """x_ref: (1, C, R, 128) logits; t_ref: (1, R, 128) int targets.

    `alpha` is None or a tuple of `num_classes` Python floats (constants).
    Padded pixels carry the sentinel target -1 and contribute exactly 0.
    """
    j = pl.program_id(2)

    # Output block index depends only on the two parallel grid axes, so it is
    # VMEM-resident across the whole inner ("arbitrary") axis: zero on the
    # first step, accumulate, single HBM writeback per (n, s) slice.
    @pl.when(j == 0)
    def _():
        out_ref[...] = jnp.zeros_like(out_ref)

    t = t_ref[0].astype(jnp.int32)                        # (R, 128) dense

    # Pass 1: running per-pixel max over the (unrolled) class axis.
    m = x_ref[0, 0].astype(jnp.float32)                   # (R, 128)
    for c in range(1, num_classes):
        m = jnp.maximum(m, x_ref[0, c].astype(jnp.float32))

    # Pass 2: sum(exp) plus gather-as-select of the target logit (and alpha).
    sum_exp = jnp.zeros_like(m)
    x_t = jnp.zeros_like(m)
    w = None if alpha is None else jnp.zeros_like(m)
    for c in range(num_classes):
        xc = x_ref[0, c].astype(jnp.float32) - m
        sum_exp = sum_exp + jnp.exp(xc)
        sel = t == c
        x_t = jnp.where(sel, xc, x_t)
        if alpha is not None:
            # alpha[target]; stays 0 for the padding sentinel (-1).
            w = jnp.where(sel, jnp.float32(alpha[c]), w)
    if alpha is None:
        w = (t >= 0).astype(jnp.float32)                  # validity mask only

    logpt = x_t - jnp.log(sum_exp)                        # (R, 128)
    pt = jnp.exp(logpt)

    g = float(gamma)
    if g == 0.0:
        loss = -logpt * w
    else:
        # exp() may overshoot 1.0 by an ulp; clamp so non-integer gamma does
        # not produce NaN from a tiny negative base.
        one_minus_pt = jnp.maximum(1.0 - pt, 0.0)
        if g.is_integer() and 0 < int(g) <= 8:
            focal = one_minus_pt
            for _ in range(int(g) - 1):
                focal = focal * one_minus_pt
        else:
            focal = one_minus_pt ** g
        loss = -focal * logpt * w

    # Dense partial-sum accumulate: fold (R, 128) -> (1, 8, 128) with plain
    # VPU adds (free vreg-axis regroup); final scalar reduce is in the wrapper.
    r = loss.shape[0]
    out_ref[...] += loss.reshape(r // 8, 8, 128).sum(axis=0, keepdims=True)


def _cdiv(a, b):
    return -(-a // b)


def _round_up(a, b):
    return _cdiv(a, b) * b


def focal_loss(logits_nchw, target_nhw, *, gamma=0.0, alpha=None,
               size_average=True, target_block_bytes=4 * 1024 * 1024,
               vmem_limit_bytes=32 * 1024 * 1024):
    """Focal loss matching the PyTorch module's forward semantics.

    logits_nchw: (N, C, H, W) float logits (f32 or bf16; math is f32).
    target_nhw:  (N, H, W) integer class indices in [0, C).
    alpha: None | float | sequence of per-class weights (concrete values).
    """
    N, C, H, W = logits_nchw.shape
    HW = H * W

    # --- alpha: baked per-class constants (no per-pixel HBM stream). --------
    if alpha is None:
        alpha_tuple = None
    else:
        if isinstance(alpha, (float, int)):
            base = [float(alpha), 1.0 - float(alpha)]
        else:
            base = [float(v) for v in
                    np.asarray(alpha, dtype=np.float64).reshape(-1)]
        # PyTorch would index-error for class ids >= len(base); keep them
        # well-defined here by padding with 1.0 (documented divergence).
        alpha_tuple = tuple((base + [1.0] * max(0, C - len(base)))[:C])

    # --- narrow target dtype for streaming (4 -> 1-2 B/pixel). --------------
    if C <= 127:
        tgt_dtype = jnp.int8
    elif C <= 32767:
        tgt_dtype = jnp.int16
    else:
        tgt_dtype = jnp.int32

    # --- tiling: pixel axis -> (rows, 128), sublane+lane dense blocks. ------
    rows = _cdiv(HW, 128)
    bytes_per_row = C * 128 * logits_nchw.dtype.itemsize
    max_rows = max(8, min(2048, (target_block_bytes // bytes_per_row) // 8 * 8))
    num_blocks = _cdiv(rows, max_rows)
    if N == 1 and rows >= 64 and num_blocks % 2 == 1:
        # Guarantee a 2-way split of the pixel-block axis so both v7x
        # TensorCores get work when there is no batch parallelism.
        num_blocks += 1
    # Row alignment: 8 keeps the in-kernel (R//8, 8, 128) fold free; 32 keeps
    # sub-32-bit target blocks tile-aligned when the array is actually split.
    align = 8 if num_blocks == 1 else 32
    tile_rows = _round_up(_cdiv(rows, num_blocks), align)
    rows_pad = tile_rows * num_blocks
    HW_pad = rows_pad * 128

    x = logits_nchw.reshape(N, C, HW)
    t = target_nhw.reshape(N, HW)
    pad = HW_pad - HW
    if pad:
        x = jnp.pad(x, ((0, 0), (0, 0), (0, pad)))
        t = jnp.pad(t, ((0, 0), (0, pad)), constant_values=-1)  # sentinel
    x = x.reshape(N, C, rows_pad, 128)
    t = t.reshape(N, rows_pad, 128).astype(tgt_dtype)

    # Split the pixel-block axis across a second parallel grid axis when even.
    S = 2 if num_blocks % 2 == 0 else 1
    J = num_blocks // S

    kernel = functools.partial(_focal_loss_kernel, gamma=float(gamma),
                               alpha=alpha_tuple, num_classes=C)

    partials = pl.pallas_call(
        kernel,
        out_shape=jax.ShapeDtypeStruct((N * S, 8, 128), jnp.float32),
        grid_spec=pltpu.PrefetchScalarGridSpec(
            num_scalar_prefetch=0,
            grid=(N, S, J),
            in_specs=[
                # logits: (1, C, tile_rows, 128), last two dims (8k, 128).
                pl.BlockSpec((1, C, tile_rows, 128),
                             lambda n, s, j: (n, 0, s * J + j, 0)),
                # targets: narrow-int, sublane+lane dense.
                pl.BlockSpec((1, tile_rows, 128),
                             lambda n, s, j: (n, s * J + j, 0)),
            ],
            # One dense partial-sum block per (n, s) slice; invariant along
            # the arbitrary axis j => VMEM-resident accumulator.
            out_specs=pl.BlockSpec((1, 8, 128),
                                   lambda n, s, j: (n * S + s, 0, 0)),
        ),
        compiler_params=pltpu.CompilerParams(
            dimension_semantics=("parallel", "parallel", "arbitrary"),
            vmem_limit_bytes=vmem_limit_bytes),
    )(x, t)

    total = jnp.sum(partials)                              # tiny XLA reduce
    if size_average:
        return total / jnp.float32(N * HW)
    return total


def _focal_loss_ref(logits_nchw, target_nhw, *, gamma, alpha, size_average):
    N, C, H, W = logits_nchw.shape
    x = logits_nchw.reshape(N, C, H * W).transpose(0, 2, 1).reshape(-1, C)
    t = target_nhw.reshape(-1).astype(jnp.int32)
    logsm = jax.nn.log_softmax(x.astype(jnp.float32), axis=1)
    logpt = jnp.take_along_axis(logsm, t[:, None], axis=1)[:, 0]
    pt = jnp.exp(logpt)
    if alpha is not None:
        if isinstance(alpha, (float, int)):
            base = [float(alpha), 1.0 - float(alpha)]
        else:
            base = [float(v) for v in
                    np.asarray(alpha, dtype=np.float64).reshape(-1)]
        a = jnp.asarray((base + [1.0] * max(0, C - len(base)))[:C], jnp.float32)
        logpt = logpt * a[t]
    loss = -1.0 * (1.0 - pt) ** gamma * logpt
    return loss.mean() if size_average else loss.sum()


if __name__ == "__main__":
    key = jax.random.PRNGKey(0)
    k1, k2, k3, k4 = jax.random.split(key, 4)

    # Case 1: per-class alpha list, gamma=2, mean reduction.
    N, C, H, W = 2, 4, 16, 16
    logits = jax.random.normal(k1, (N, C, H, W), dtype=jnp.float32)
    target = jax.random.randint(k2, (N, H, W), 0, C, dtype=jnp.int32)
    gamma = 2.0
    alpha = [0.1, 0.2, 0.3, 0.4]
    out = focal_loss(logits, target, gamma=gamma, alpha=alpha, size_average=True)
    out = jax.block_until_ready(out)
    ref = _focal_loss_ref(logits, target, gamma=gamma, alpha=alpha,
                          size_average=True)
    assert jnp.allclose(out, ref, rtol=1e-5, atol=1e-5), (out, ref)

    # Case 2: gamma=0, no alpha, sum reduction.
    out2 = focal_loss(logits, target, gamma=0.0, alpha=None, size_average=False)
    out2 = jax.block_until_ready(out2)
    ref2 = _focal_loss_ref(logits, target, gamma=0.0, alpha=None,
                           size_average=False)
    assert jnp.allclose(out2, ref2, rtol=1e-5, atol=1e-5), (out2, ref2)

    # Case 3: binary case, scalar alpha, non-integer gamma (pow path + clamp).
    C2 = 2
    logits_b = jax.random.normal(k3, (N, C2, H, W), dtype=jnp.float32)
    target_b = jax.random.randint(k4, (N, H, W), 0, C2, dtype=jnp.int32)
    out3 = focal_loss(logits_b, target_b, gamma=2.5, alpha=0.25,
                      size_average=True)
    out3 = jax.block_until_ready(out3)
    ref3 = _focal_loss_ref(logits_b, target_b, gamma=2.5, alpha=0.25,
                           size_average=True)
    assert jnp.allclose(out3, ref3, rtol=1e-5, atol=1e-5), (out3, ref3)

    print("KERNEL_OK")
</pallas_src>

<mosaic_0001>
module attributes {stable_mosaic.version = 11 : i64} {
  func.func @_focal_loss_kernel(%arg0: i32, %arg1: i32, %arg2: i32, %arg3: memref<1x4x8x128xf32, #tpu.memory_space<vmem>>, %arg4: memref<1x8x128xi8, #tpu.memory_space<vmem>>, %arg5: memref<1x8x128xf32, #tpu.memory_space<vmem>>) attributes {dimension_semantics = [#tpu.dimension_semantics<parallel>, #tpu.dimension_semantics<parallel>, #tpu.dimension_semantics<arbitrary>], iteration_bounds = array<i64: 2, 1, 1>, scalar_prefetch = 0 : i64, scratch_operands = 0 : i64, tpu.core_type = #tpu.core_type<tc>, window_params = [{transform_indices = @transform_0, window_bounds = array<i64: 1, 4, 8, 128>}, {transform_indices = @transform_1, window_bounds = array<i64: 1, 8, 128>}, {transform_indices = @transform_2, window_bounds = array<i64: 1, 8, 128>}]} {
    %c0_i32 = arith.constant 0 : i32
    %0 = arith.cmpi eq, %arg2, %c0_i32 : i32
    %1 = arith.extui %0 : i1 to i32
    %c0_i32_0 = arith.constant 0 : i32
    %2 = arith.cmpi ne, %1, %c0_i32_0 : i32
    scf.if %2 {
      %cst_49 = arith.constant 0.000000e+00 : f32
      %78 = vector.broadcast %cst_49 : f32 to vector<1x8x128xf32>
      %c0_50 = arith.constant 0 : index
      %c0_51 = arith.constant 0 : index
      %c0_52 = arith.constant 0 : index
      %79 = vector.load %arg5[%c0_50, %c0_51, %c0_52] : memref<1x8x128xf32, #tpu.memory_space<vmem>>, vector<1x8x128xf32>
      tpu.vector_store %arg5[%c0_50, %c0_51, %c0_52], %78 {strides = array<i32>} : memref<1x8x128xf32, #tpu.memory_space<vmem>>, vector<1x8x128xf32>,
    } else {
    }
    %c0 = arith.constant 0 : index
    %c0_1 = arith.constant 0 : index
    %c0_2 = arith.constant 0 : index
    %3 = vector.load %arg4[%c0, %c0_1, %c0_2] : memref<1x8x128xi8, #tpu.memory_space<vmem>>, vector<1x8x128xi8>
    %4 = vector.shape_cast %3 : vector<1x8x128xi8> to vector<8x128xi8>
    %5 = arith.extsi %4 : vector<8x128xi8> to vector<8x128xi32>
    %c0_3 = arith.constant 0 : index
    %c0_4 = arith.constant 0 : index
    %c0_5 = arith.constant 0 : index
    %c0_6 = arith.constant 0 : index
    %6 = vector.load %arg3[%c0_3, %c0_4, %c0_5, %c0_6] : memref<1x4x8x128xf32, #tpu.memory_space<vmem>>, vector<1x1x8x128xf32>
    %7 = vector.shape_cast %6 : vector<1x1x8x128xf32> to vector<8x128xf32>
    %c0_7 = arith.constant 0 : index
    %c1 = arith.constant 1 : index
    %c0_8 = arith.constant 0 : index
    %c0_9 = arith.constant 0 : index
    %8 = vector.load %arg3[%c0_7, %c1, %c0_8, %c0_9] : memref<1x4x8x128xf32, #tpu.memory_space<vmem>>, vector<1x1x8x128xf32>
    %9 = vector.shape_cast %8 : vector<1x1x8x128xf32> to vector<8x128xf32>
    %10 = arith.maximumf %7, %9 : vector<8x128xf32>
    %c0_10 = arith.constant 0 : index
    %c2 = arith.constant 2 : index
    %c0_11 = arith.constant 0 : index
    %c0_12 = arith.constant 0 : index
    %11 = vector.load %arg3[%c0_10, %c2, %c0_11, %c0_12] : memref<1x4x8x128xf32, #tpu.memory_space<vmem>>, vector<1x1x8x128xf32>
    %12 = vector.shape_cast %11 : vector<1x1x8x128xf32> to vector<8x128xf32>
    %13 = arith.maximumf %10, %12 : vector<8x128xf32>
    %c0_13 = arith.constant 0 : index
    %c3 = arith.constant 3 : index
    %c0_14 = arith.constant 0 : index
    %c0_15 = arith.constant 0 : index
    %14 = vector.load %arg3[%c0_13, %c3, %c0_14, %c0_15] : memref<1x4x8x128xf32, #tpu.memory_space<vmem>>, vector<1x1x8x128xf32>
    %15 = vector.shape_cast %14 : vector<1x1x8x128xf32> to vector<8x128xf32>
    %16 = arith.maximumf %13, %15 : vector<8x128xf32>
    %cst = arith.constant 0.000000e+00 : f32
    %17 = vector.broadcast %cst : f32 to vector<8x128xf32>
    %cst_16 = arith.constant 0.000000e+00 : f32
    %18 = vector.broadcast %cst_16 : f32 to vector<8x128xf32>
    %cst_17 = arith.constant 0.000000e+00 : f32
    %19 = vector.broadcast %cst_17 : f32 to vector<8x128xf32>
    %c0_18 = arith.constant 0 : index
    %c0_19 = arith.constant 0 : index
    %c0_20 = arith.constant 0 : index
    %c0_21 = arith.constant 0 : index
    %20 = vector.load %arg3[%c0_18, %c0_19, %c0_20, %c0_21] : memref<1x4x8x128xf32, #tpu.memory_space<vmem>>, vector<1x1x8x128xf32>
    %21 = vector.shape_cast %20 : vector<1x1x8x128xf32> to vector<8x128xf32>
    %22 = arith.subf %21, %16 : vector<8x128xf32>
    %23 = math.exp %22 : vector<8x128xf32>
    %24 = arith.addf %17, %23 : vector<8x128xf32>
    %c0_i32_22 = arith.constant 0 : i32
    %25 = vector.broadcast %c0_i32_22 : i32 to vector<8x128xi32>
    %26 = arith.cmpi eq, %5, %25 : vector<8x128xi32>
    %27 = arith.select %26, %22, %18 : vector<8x128xi1>, vector<8x128xf32>
    %cst_23 = arith.constant 1.000000e-01 : f32
    %28 = vector.broadcast %cst_23 : f32 to vector<8x128xf32>
    %29 = arith.select %26, %28, %19 : vector<8x128xi1>, vector<8x128xf32>
    %c0_24 = arith.constant 0 : index
    %c1_25 = arith.constant 1 : index
    %c0_26 = arith.constant 0 : index
    %c0_27 = arith.constant 0 : index
    %30 = vector.load %arg3[%c0_24, %c1_25, %c0_26, %c0_27] : memref<1x4x8x128xf32, #tpu.memory_space<vmem>>, vector<1x1x8x128xf32>
    %31 = vector.shape_cast %30 : vector<1x1x8x128xf32> to vector<8x128xf32>
    %32 = arith.subf %31, %16 : vector<8x128xf32>
    %33 = math.exp %32 : vector<8x128xf32>
    %34 = arith.addf %24, %33 : vector<8x128xf32>
    %c1_i32 = arith.constant 1 : i32
    %35 = vector.broadcast %c1_i32 : i32 to vector<8x128xi32>
    %36 = arith.cmpi eq, %5, %35 : vector<8x128xi32>
    %37 = arith.select %36, %32, %27 : vector<8x128xi1>, vector<8x128xf32>
    %cst_28 = arith.constant 2.000000e-01 : f32
    %38 = vector.broadcast %cst_28 : f32 to vector<8x128xf32>
    %39 = arith.select %36, %38, %29 : vector<8x128xi1>, vector<8x128xf32>
    %c0_29 = arith.constant 0 : index
    %c2_30 = arith.constant 2 : index
    %c0_31 = arith.constant 0 : index
    %c0_32 = arith.constant 0 : index
    %40 = vector.load %arg3[%c0_29, %c2_30, %c0_31, %c0_32] : memref<1x4x8x128xf32, #tpu.memory_space<vmem>>, vector<1x1x8x128xf32>
    %41 = vector.shape_cast %40 : vector<1x1x8x128xf32> to vector<8x128xf32>
    %42 = arith.subf %41, %16 : vector<8x128xf32>
    %43 = math.exp %42 : vector<8x128xf32>
    %44 = arith.addf %34, %43 : vector<8x128xf32>
    %c2_i32 = arith.constant 2 : i32
    %45 = vector.broadcast %c2_i32 : i32 to vector<8x128xi32>
    %46 = arith.cmpi eq, %5, %45 : vector<8x128xi32>
    %47 = arith.select %46, %42, %37 : vector<8x128xi1>, vector<8x128xf32>
    %cst_33 = arith.constant 3.000000e-01 : f32
    %48 = vector.broadcast %cst_33 : f32 to vector<8x128xf32>
    %49 = arith.select %46, %48, %39 : vector<8x128xi1>, vector<8x128xf32>
    %c0_34 = arith.constant 0 : index
    %c3_35 = arith.constant 3 : index
    %c0_36 = arith.constant 0 : index
    %c0_37 = arith.constant 0 : index
    %50 = vector.load %arg3[%c0_34, %c3_35, %c0_36, %c0_37] : memref<1x4x8x128xf32, #tpu.memory_space<vmem>>, vector<1x1x8x128xf32>
    %51 = vector.shape_cast %50 : vector<1x1x8x128xf32> to vector<8x128xf32>
    %52 = arith.subf %51, %16 : vector<8x128xf32>
    %53 = math.exp %52 : vector<8x128xf32>
    %54 = arith.addf %44, %53 : vector<8x128xf32>
    %c3_i32 = arith.constant 3 : i32
    %55 = vector.broadcast %c3_i32 : i32 to vector<8x128xi32>
    %56 = arith.cmpi eq, %5, %55 : vector<8x128xi32>
    %57 = arith.select %56, %52, %47 : vector<8x128xi1>, vector<8x128xf32>
    %cst_38 = arith.constant 4.000000e-01 : f32
    %58 = vector.broadcast %cst_38 : f32 to vector<8x128xf32>
    %59 = arith.select %56, %58, %49 : vector<8x128xi1>, vector<8x128xf32>
    %60 = math.log %54 : vector<8x128xf32>
    %61 = arith.subf %57, %60 : vector<8x128xf32>
    %62 = math.exp %61 : vector<8x128xf32>
    %cst_39 = arith.constant 1.000000e+00 : f32
    %63 = vector.broadcast %cst_39 : f32 to vector<8x128xf32>
    %64 = arith.subf %63, %62 : vector<8x128xf32>
    %cst_40 = arith.constant 0.000000e+00 : f32
    %65 = vector.broadcast %cst_40 : f32 to vector<8x128xf32>
    %66 = arith.maximumf %64, %65 : vector<8x128xf32>
    %67 = arith.mulf %66, %66 : vector<8x128xf32>
    %cst_41 = arith.constant 0.000000e+00 : f32
    %68 = vector.broadcast %cst_41 : f32 to vector<8x128xf32>
    %69 = arith.subf %68, %67 : vector<8x128xf32>
    %70 = arith.mulf %69, %61 : vector<8x128xf32>
    %71 = arith.mulf %70, %59 : vector<8x128xf32>
    %c0_42 = arith.constant 0 : index
    %c0_43 = arith.constant 0 : index
    %c0_44 = arith.constant 0 : index
    %72 = vector.load %arg5[%c0_42, %c0_43, %c0_44] : memref<1x8x128xf32, #tpu.memory_space<vmem>>, vector<1x8x128xf32>
    %73 = vector.shape_cast %71 : vector<8x128xf32> to vector<1x8x128xf32>
    %cst_45 = arith.constant dense<0.000000e+00> : vector<8x128xf32>
    %74 = vector.multi_reduction <add>, %73, %cst_45 [0] : vector<1x8x128xf32> to vector<8x128xf32>
    %75 = vector.shape_cast %74 : vector<8x128xf32> to vector<1x8x128xf32>
    %76 = arith.addf %72, %75 : vector<1x8x128xf32>
    %c0_46 = arith.constant 0 : index
    %c0_47 = arith.constant 0 : index
    %c0_48 = arith.constant 0 : index
    %77 = vector.load %arg5[%c0_46, %c0_47, %c0_48] : memref<1x8x128xf32, #tpu.memory_space<vmem>>, vector<1x8x128xf32>
    tpu.vector_store %arg5[%c0_46, %c0_47, %c0_48], %76 {strides = array<i32>} : memref<1x8x128xf32, #tpu.memory_space<vmem>>, vector<1x8x128xf32>,
    return
  }
  func.func @transform_0(%arg0: i32, %arg1: i32, %arg2: i32) -> (i32, i32, i32, i32) {
    %c1_i32 = arith.constant 1 : i32
    %0 = arith.muli %arg1, %c1_i32 : i32
    %1 = arith.addi %0, %arg2 : i32
    %c0_i32 = arith.constant 0 : i32
    %c0_i32_0 = arith.constant 0 : i32
    %c0_i32_1 = arith.constant 0 : i32
    return %arg0, %c0_i32, %1, %c0_i32_0 : i32, i32, i32, i32
  }
  func.func @transform_1(%arg0: i32, %arg1: i32, %arg2: i32) -> (i32, i32, i32) {
    %c1_i32 = arith.constant 1 : i32
    %0 = arith.muli %arg1, %c1_i32 : i32
    %1 = arith.addi %0, %arg2 : i32
    %c0_i32 = arith.constant 0 : i32
    %c0_i32_0 = arith.constant 0 : i32
    return %arg0, %1, %c0_i32 : i32, i32, i32
  }
  func.func @transform_2(%arg0: i32, %arg1: i32, %arg2: i32) -> (i32, i32, i32) {
    %c1_i32 = arith.constant 1 : i32
    %0 = arith.muli %arg0, %c1_i32 : i32
    %1 = arith.addi %0, %arg1 : i32
    %c0_i32 = arith.constant 0 : i32
    %c0_i32_0 = arith.constant 0 : i32
    %c0_i32_1 = arith.constant 0 : i32
    return %1, %c0_i32, %c0_i32_0 : i32, i32, i32
  }
}

</mosaic_0001>

<llo_original>
// kernel: tpu_custom_call.1
$region0: #{tpu_custom_call.1}
  #allocation0 [shape = 'u32[]', space=smem, size = 0x4, offset = 0x4, fixed_abs, tag = 'smem constant byte address 0x4 - core index']
  #allocation1 [shape = 'u32[72,128]{1,0:T(1,128)}', space=vmem, size = 0x9000, scoped, tag = 'internal scratch']
  %s0 = inlined_call_operand.hbm [shape: f32[2,4,8,128], index: 0, kind: input, shape index: {}]
  %s1 = inlined_call_operand.hbm [shape: s8[2,8,128], index: 1, kind: input, shape index: {}]
  %s2 = inlined_call_operand.hbm [shape: f32[2,8,128], index: 2, kind: output, shape index: {}]
  %s3 = sld [smem:[#allocation0]]
  $region53: #{tpu_custom_call.1} parent=0
    _
  %s5 = ssub.s32 1, %s3
  %s6 = scalar_select 0, %s5, %s3
  $region1: #{tpu_custom_call.1} parent=0
    #allocation2 [shape = 'u8[32768]{0}', space=vmem, size = 0x8000, scoped, tag = 'input window, operand 0']
    #allocation3 [shape = 's32[2]{0}', space=sflag, size = 0x8, scoped, tag = 'scoped memory for tpu_custom_call.1']
    #allocation4 [shape = 's32[2]{0}', space=sflag, size = 0x8, scoped, tag = 'scoped memory for tpu_custom_call.1']
    #allocation5 [shape = 'u8[2048]{0}', space=vmem, size = 0x800, scoped, tag = 'input window, operand 1']
    #allocation6 [shape = 's32[2]{0}', space=sflag, size = 0x8, scoped, tag = 'scoped memory for tpu_custom_call.1']
    #allocation7 [shape = 'u8[8192]{0}', space=vmem, size = 0x2000, scoped, tag = 'output window, operand 0']
    %7 = vsyncpa [#allocation3], 0
    %s8 = scalar_lea.sflag [#allocation3], 1
    %9 = vsyncpa %s8, 0
    %10 = vsyncpa [#allocation6], 0
    %s11 = scalar_lea.sflag [#allocation6], 1
    %12 = vsyncpa %s11, 0
    %13 = vsyncpa [#allocation4], 0
    %s14 = scalar_lea.sflag [#allocation4], 1
    %15 = vsyncpa %s14, 0
    loop: start=0, step=1, limit=4
    $region2: #{tpu_custom_call.1} parent=1 // loop_pre_header
      _
    $region3: #{tpu_custom_call.1} parent=1 // loop_header
      %s17 = sphi 0, %s21
      %p18 = scmp.ge.s32.totalorder %s17, 4
      %s24 = sphi 0, %s43
      %s25 = sphi 0, %s39
      %s26 = sphi 0, %s35
      %s27 = sphi 0, %s24
      %s28 = sphi 0, %s25
      %s29 = sphi 0, %s26
      %s30 = sphi 0, %s27
      %s31 = sphi 0, %s28
      %s32 = sphi 0, %s29
      %s50 = sphi 0, %s52
      %s53 = sphi 0, %s50
      %s54 = sphi 0, %s53
      %s70 = sphi 0, %s54
      %s80 = sphi 0, %s82
      %s83 = sphi 0, %s80
      %s84 = sphi 0, %s83
      %s100 = sphi 0, %s84
      %s108 = sphi 0, %s110
      %s111 = sphi 0, %s108
      %s112 = sphi 0, %s111
      %s128 = sphi 0, %s112
    $region4: #{tpu_custom_call.1} parent=1 // loop_header_branch
      %20 = sbr.rel (%p18) target = $region8
    $region5: #{tpu_custom_call.1} parent=1 // loop_body
      %s22 = ssub.s32 %s17, 1
      %s23 = ssub.s32 %s17, 2
      %s33 = sadd.s32 1, %s26
      %p34 = scmp.ge.s32.totalorder %s33, 1
      %s35 = scalar_select %p34, 0, %s33
      %s36 = sadd.s32 1, %s25
      %s37 = scalar_select %p34, %s36, %s25
      %p38 = scmp.ge.s32.totalorder %s37, 1
      %s39 = scalar_select %p38, 0, %s37
      %s40 = sadd.s32 1, %s24
      %s41 = scalar_select %p38, %s40, %s24
      %p42 = scmp.ge.s32.totalorder %s41, 2
      %s43 = scalar_select %p42, 0, %s41
      %s44 = sadd.s32 %s25, %s26
      %s45 = sadd.s32 %s39, %s35
      %s46 = ssub.s32 %s24, %s43
      %s47 = ssub.s32 %s44, %s45
      %s48 = sor.u32 %s46, %s47
      %p49 = scmp.eq.s32.totalorder %s48, 0
      %s51 = sadd.s32 %s50, 1
      %s52 = scalar_select %p49, %s50, %s51
      %p55 = pneg %p49
      %p56 = scmp.eq.s32.totalorder %s17, 1
      %p57 = por %p55, %p56
      %p58 = scmp.ne.s32.totalorder %s50, %s53
      %p59 = scmp.eq.s32.totalorder %s17, 0
      %p60 = por %p58, %p59
      %p61 = scmp.ne.s32.totalorder %s50, %s53
      %p62 = scmp.eq.s32.totalorder %s22, 1
      %p63 = por %p61, %p62
      %p64 = scmp.ne.s32.totalorder %s53, %s54
      %p65 = scmp.eq.s32.totalorder %s22, 0
      %p66 = por %p64, %p65
      %p67 = scmp.ne.s32.totalorder %s53, %s54
      %p68 = scmp.eq.s32.totalorder %s23, 1
      %p69 = por %p67, %p68
      %p71 = scmp.ne.s32.totalorder %s54, %s70
      %p72 = scmp.eq.s32.totalorder %s23, 0
      %p73 = por %p71, %p72
      %s74 = sadd.s32 %s25, %s26
      %s75 = sadd.s32 %s39, %s35
      %s76 = ssub.s32 %s24, %s43
      %s77 = ssub.s32 %s74, %s75
      %s78 = sor.u32 %s76, %s77
      %p79 = scmp.eq.s32.totalorder %s78, 0
      %s81 = sadd.s32 %s80, 1
      %s82 = scalar_select %p79, %s80, %s81
      %p85 = pneg %p79
      %p86 = scmp.eq.s32.totalorder %s17, 1
      %p87 = por %p85, %p86
      %p88 = scmp.ne.s32.totalorder %s80, %s83
      %p89 = scmp.eq.s32.totalorder %s17, 0
      %p90 = por %p88, %p89
      %p91 = scmp.ne.s32.totalorder %s80, %s83
      %p92 = scmp.eq.s32.totalorder %s22, 1
      %p93 = por %p91, %p92
      %p94 = scmp.ne.s32.totalorder %s83, %s84
      %p95 = scmp.eq.s32.totalorder %s22, 0
      %p96 = por %p94, %p95
      %p97 = scmp.ne.s32.totalorder %s83, %s84
      %p98 = scmp.eq.s32.totalorder %s23, 1
      %p99 = por %p97, %p98
      %p101 = scmp.ne.s32.totalorder %s84, %s100
      %p102 = scmp.eq.s32.totalorder %s23, 0
      %p103 = por %p101, %p102
      %s104 = sadd.s32 %s24, %s25
      %s105 = sadd.s32 %s43, %s39
      %s106 = ssub.s32 %s104, %s105
      %p107 = scmp.eq.s32.totalorder %s106, 0
      %s109 = sadd.s32 %s108, 1
      %s110 = scalar_select %p107, %s108, %s109
      %p113 = pneg %p107
      %p114 = scmp.eq.s32.totalorder %s17, 1
      %p115 = por %p113, %p114
      %p116 = scmp.ne.s32.totalorder %s108, %s111
      %p117 = scmp.eq.s32.totalorder %s17, 0
      %p118 = por %p116, %p117
      %p119 = scmp.ne.s32.totalorder %s108, %s111
      %p120 = scmp.eq.s32.totalorder %s22, 1
      %p121 = por %p119, %p120
      %p122 = scmp.ne.s32.totalorder %s111, %s112
      %p123 = scmp.eq.s32.totalorder %s22, 0
      %p124 = por %p122, %p123
      %p125 = scmp.ne.s32.totalorder %s111, %s112
      %p126 = scmp.eq.s32.totalorder %s23, 1
      %p127 = por %p125, %p126
      %p129 = scmp.ne.s32.totalorder %s112, %s128
      %p130 = scmp.eq.s32.totalorder %s23, 0
      %p131 = por %p129, %p130
      %p132 = scmp.le.s32.totalorder 1, %s17
      %p133 = scmp.lt.s32.totalorder %s17, 3
      %p134 = pnand %p132, %p133
      %p135 = pneg %p134
      // Predicated region
      $region9: #{tpu_custom_call.1} parent=5 // pred_check
        _
      $region10: #{tpu_custom_call.1} parent=5 // pred_check_branch
        %137 = sbr.rel (%p134) target = $region12
      $region11: #{tpu_custom_call.1} parent=5 // pred_region
        %s138 = ssub.s32 %s17, 1
      $region12: #{tpu_custom_call.1} parent=5 // pred_fallthru
        _
      %p139 = scmp.lt.s32.totalorder %s17, 2
      // Predicated region
      $region13: #{tpu_custom_call.1} parent=5 // pred_check
        %p140 = pneg %p139
      $region14: #{tpu_custom_call.1} parent=5 // pred_check_branch
        %142 = sbr.rel (%p140) target = $region16
      $region15: #{tpu_custom_call.1} parent=5 // pred_region
        // Predicated region
        $region17: #{tpu_custom_call.1} parent=15 // pred_check
          %p143 = pneg %p60
        $region18: #{tpu_custom_call.1} parent=15 // pred_check_branch
          %145 = sbr.rel (%p143) target = $region20
        $region19: #{tpu_custom_call.1} parent=15 // pred_region
          %s146 = sand.u32 %s50, 1
          %s147 = scalar_lea.sflag [#allocation3], %s146
          %s148 = sand.u32 %s50, 1
          %s149 = smul.addr %s148, 32
          %s150 = scalar_lea.vmem [#allocation2], %s149
          %s151 = sadd.s32 %s25, %s26
          %153 = vsyncadd %s147, 0
          %s154 = smul.addr %s24, 4
          %s155 = sadd.s32 %s151, %s154
          %s156 = smul.addr %s155, 8
          %s157 = scalar_lea.hbm %s0, %s156
          %s158 = sshll.u32 %s157, 4
          %s159 = int_to_ptr.hbm [resolvable:$true] %s158
          %s160 = sshll.u32 %s150, 4
          %s161 = int_to_ptr.vmem [resolvable:$true] %s160
          %166 = dma.hbm_to_vmem [thread:$0]  %s159, 512, %s161, %s147, 128, 128, 8
        $region20: #{tpu_custom_call.1} parent=15 // pred_fallthru
          _
        // Predicated region
        $region21: #{tpu_custom_call.1} parent=15 // pred_check
          %p167 = pneg %p90
        $region22: #{tpu_custom_call.1} parent=15 // pred_check_branch
          %169 = sbr.rel (%p167) target = $region24
        $region23: #{tpu_custom_call.1} parent=15 // pred_region
          %s170 = sand.u32 %s80, 1
          %s171 = scalar_lea.sflag [#allocation6], %s170
          %s172 = sand.u32 %s80, 1
          %s173 = smul.addr %s172, 2
          %s174 = scalar_lea.vmem [#allocation5], %s173
          %s175 = sadd.s32 %s25, %s26
          %177 = vsyncadd %s171, 0
          %s178 = sadd.s32 %s175, %s24
          %s179 = smul.addr %s178, 2
          %s180 = scalar_lea.hbm %s1, %s179
          %s182 = sshll.u32 %s180, 4
          %s183 = int_to_ptr.hbm [resolvable:$true] %s182
          %s184 = sshll.u32 %s174, 4
          %s185 = int_to_ptr.vmem [resolvable:$true] %s184
          %187 = dma.hbm_to_vmem [thread:$0]  %s183, 32, %s185, %s171
        $region24: #{tpu_custom_call.1} parent=15 // pred_fallthru
          _
      $region16: #{tpu_custom_call.1} parent=5 // pred_fallthru
        _
      %p188 = scmp.le.s32.totalorder 1, %s17
      %p189 = scmp.lt.s32.totalorder %s17, 3
      %p190 = pnand %p188, %p189
      %p191 = pneg %p190
      // Predicated region
      $region25: #{tpu_custom_call.1} parent=5 // pred_check
        _
      $region26: #{tpu_custom_call.1} parent=5 // pred_check_branch
        %193 = sbr.rel (%p190) target = $region28
      $region27: #{tpu_custom_call.1} parent=5 // pred_region
        %s194 = ssub.s32 %s17, 1
        %s195 = sand.u32 %s53, 1
        %s196 = scalar_lea.sflag [#allocation3], %s195
        %s197 = sand.u32 %s53, 1
        %s198 = smul.addr %s197, 32
        %s199 = scalar_lea.vmem [#allocation2], %s198
        // Predicated region
        $region29: #{tpu_custom_call.1} parent=27 // pred_check
          %p200 = pneg %p66
        $region30: #{tpu_custom_call.1} parent=27 // pred_check_branch
          %202 = sbr.rel (%p200) target = $region32
        $region31: #{tpu_custom_call.1} parent=27 // pred_region
          %204 = dma.done %s196, 512
        $region32: #{tpu_custom_call.1} parent=27 // pred_fallthru
          _
        %s205 = sand.u32 %s83, 1
        %s206 = scalar_lea.sflag [#allocation6], %s205
        %s207 = sand.u32 %s83, 1
        %s208 = smul.addr %s207, 2
        %s209 = scalar_lea.vmem [#allocation5], %s208
        // Predicated region
        $region33: #{tpu_custom_call.1} parent=27 // pred_check
          %p210 = pneg %p96
        $region34: #{tpu_custom_call.1} parent=27 // pred_check_branch
          %212 = sbr.rel (%p210) target = $region36
        $region35: #{tpu_custom_call.1} parent=27 // pred_region
          %214 = dma.done %s206, 32
        $region36: #{tpu_custom_call.1} parent=27 // pred_fallthru
          _
        %s215 = sand.u32 %s53, 1
        %s216 = scalar_lea.sflag [#allocation3], %s215
        %s217 = sand.u32 %s53, 1
        %s218 = smul.addr %s217, 32
        %s219 = scalar_lea.vmem [#allocation2], %s218
        %p220 = pneg %p66
        %p221 = pneg %p63
        %s222 = sand.u32 %s83, 1
        %s223 = scalar_lea.sflag [#allocation6], %s222
        %s224 = sand.u32 %s83, 1
        %s225 = smul.addr %s224, 2
        %s226 = scalar_lea.vmem [#allocation5], %s225
        %p227 = pneg %p96
        %p228 = pneg %p93
        %p229 = pneg %p124
        %p230 = pneg %p121
        %s231 = sand.u32 %s111, 1
        %s232 = scalar_lea.sflag [#allocation4], %s231
        %s233 = sand.u32 %s111, 1
        %s234 = smul.addr %s233, 8
        %s235 = scalar_lea.vmem [#allocation7], %s234
        %s236 = sadd.s32 %s28, %s29
        %s237 = sadd.s32 %s28, %s29
        %s238 = sadd.s32 %s27, %s28
        %p239 = scmp.eq.s32.totalorder %s29, 0
        // Predicated region
        $region37: #{tpu_custom_call.1} parent=27 // pred_check
          %p240 = pneg %p239
        $region38: #{tpu_custom_call.1} parent=27 // pred_check_branch
          %242 = sbr.rel (%p240) target = $region40
        $region39: #{tpu_custom_call.1} parent=27 // pred_region
          %243 = vst [vmem:[%s235] sm:$0xff] 0.0
        $region40: #{tpu_custom_call.1} parent=27 // pred_fallthru
          _
        %v244 = vld [vmem:[%s209] sm:$0x3]
        %v245 = vunpack.c.0.s8 %v244
        %v246 = vld [vmem:[%s199] sm:$0xff]
        %s247 = scalar_lea.vmem %s199, 8 [#allocation2]
        %v248 = vld [vmem:[%s247] sm:$0xff]
        %v249 = vmax.f32 %v246, %v248
        %s250 = scalar_lea.vmem %s199, 16 [#allocation2]
        %v251 = vld [vmem:[%s250] sm:$0xff]
        %v252 = vmax.f32 %v249, %v251
        %s253 = scalar_lea.vmem %s199, 24 [#allocation2]
        %v254 = vld [vmem:[%s253] sm:$0xff]
        %v255 = vmax.f32 %v252, %v254
        %v256 = vsub.f32 %v246, %v255
        %v257 = vmul.f32 %v256, 1.442695
        %v258 = vpow.pop %v257
        %v259 = vadd.f32 %v258, 0.0
        %vm260 = vcmp.eq.s32.totalorder %v245, 0
        %v261 = vsel %vm260, %v256, 0.0
        %v262 = vsel %vm260, 0.1, 0.0
        %v263 = vsub.f32 %v248, %v255
        %v264 = vmul.f32 %v263, 1.442695
        %v265 = vpow.pop %v264
        %v266 = vadd.f32 %v259, %v265
        %vm267 = vcmp.eq.s32.totalorder %v245, 1
        %v268 = vsel %vm267, %v263, %v261
        %v269 = vsel %vm267, 0.2, %v262
        %v270 = vsub.f32 %v251, %v255
        %v271 = vmul.f32 %v270, 1.442695
        %v272 = vpow.pop %v271
        %v273 = vadd.f32 %v266, %v272
        %vm274 = vcmp.eq.s32.totalorder %v245, 2
        %v275 = vsel %vm274, %v270, %v268
        %v276 = vsel %vm274, 0.3, %v269
        %v277 = vsub.f32 %v254, %v255
        %v278 = vmul.f32 %v277, 1.442695
        %v279 = vpow.pop %v278
        %v280 = vadd.f32 %v273, %v279
        %vm281 = vcmp.eq.s32.totalorder %v245, 3
        %v282 = vsel %vm281, %v277, %v275
        %v283 = vsel %vm281, 0.4, %v276
        %v284 = vlog2.pop %v280
        %v285 = vmul.f32 %v284, 0.6931472
        %v286 = vsub.f32 %v282, %v285
        %v287 = vmul.f32 %v286, 1.442695
        %v288 = vpow.pop %v287
        %v289 = vsub.f32 1.0, %v288
        %v290 = vmax.f32 %v289, 0.0
        %v291 = vmul.f32 %v290, %v290
        %v292 = vsub.f32 0.0, %v291
        %v293 = vmul.f32 %v292, %v286
        %v294 = vmul.f32 %v293, %v283
        %v295 = vld [vmem:[%s235] sm:$0xff]
        %v296 = vadd.f32 %v294, 0.0
        %v297 = vadd.f32 %v295, %v296
        %298 = vst [vmem:[%s235] sm:$0xff] %v297
        %s299 = sand.u32 %s111, 1
        %s300 = scalar_lea.sflag [#allocation4], %s299
        %s301 = sand.u32 %s111, 1
        %s302 = smul.addr %s301, 8
        %s303 = scalar_lea.vmem [#allocation7], %s302
        // Predicated region
        $region41: #{tpu_custom_call.1} parent=27 // pred_check
          %p304 = pneg %p121
        $region42: #{tpu_custom_call.1} parent=27 // pred_check_branch
          %306 = sbr.rel (%p304) target = $region44
        $region43: #{tpu_custom_call.1} parent=27 // pred_region
          %s307 = sadd.s32 %s27, %s28
          %309 = vsyncadd %s300, 0
          %s310 = smul.addr %s307, 8
          %s311 = scalar_lea.hbm %s2, %s310
          %s313 = sshll.u32 %s303, 4
          %s314 = int_to_ptr.vmem [resolvable:$true] %s313
          %s315 = sshll.u32 %s311, 4
          %s316 = int_to_ptr.hbm [resolvable:$true] %s315
          %318 = dma.vmem_to_hbm [thread:$0]  %s314, 128, %s316, %s300
        $region44: #{tpu_custom_call.1} parent=27 // pred_fallthru
          _
      $region28: #{tpu_custom_call.1} parent=5 // pred_fallthru
        _
      %p319 = scmp.le.s32.totalorder 2, %s17
      // Predicated region
      $region45: #{tpu_custom_call.1} parent=5 // pred_check
        %p320 = pneg %p319
      $region46: #{tpu_custom_call.1} parent=5 // pred_check_branch
        %322 = sbr.rel (%p320) target = $region48
      $region47: #{tpu_custom_call.1} parent=5 // pred_region
        %s323 = ssub.s32 %s17, 2
        // Predicated region
        $region49: #{tpu_custom_call.1} parent=47 // pred_check
          %p324 = pneg %p127
        $region50: #{tpu_custom_call.1} parent=47 // pred_check_branch
          %326 = sbr.rel (%p324) target = $region52
        $region51: #{tpu_custom_call.1} parent=47 // pred_region
          %s327 = sand.u32 %s112, 1
          %s328 = scalar_lea.sflag [#allocation4], %s327
          %s329 = sand.u32 %s112, 1
          %s330 = smul.addr %s329, 8
          %s331 = scalar_lea.vmem [#allocation7], %s330
          %333 = dma.done %s328, 128
        $region52: #{tpu_custom_call.1} parent=47 // pred_fallthru
          _
      $region48: #{tpu_custom_call.1} parent=5 // pred_fallthru
        _
    $region6: #{tpu_custom_call.1} parent=1 // loop_footer
      %s21 = sadd.s32 1, %s17
    $region7: #{tpu_custom_call.1} parent=1 // loop_footer_branch
      %16 = sbr.rel target = $region3
    $region8: #{tpu_custom_call.1} parent=1 // loop_exit
      _
    %334 = vsyncpa [#allocation3], 1
    %s335 = scalar_lea.sflag [#allocation3], 1
    %336 = vsyncpa %s335, 1
    %337 = vsyncpa [#allocation6], 1
    %s338 = scalar_lea.sflag [#allocation6], 1
    %339 = vsyncpa %s338, 1
    %340 = vsyncpa [#allocation4], 1
    %s341 = scalar_lea.sflag [#allocation4], 1
    %342 = vsyncpa %s341, 1

</llo_original>
